<compile_context>
chip_gen: v6e
topology: v6e:2x2x1
jax: 0.10.0
libtpu: 0.0.40
codegen_flags: <defaults>
</compile_context>

<pallas_src>
import functools

import jax
import jax.numpy as jnp
from jax.experimental import pallas as pl
from jax.experimental.pallas import tpu as pltpu

_EPS = 1e-5


def _round_up(n, m):
    return ((n + m - 1) // m) * m


def _packed_kernel(x_ref, w_ref, s_ref, b_ref, g_ref, bt_ref, o_ref, *, inv_d):
    """Lane-packed path: `pack` logical rows per 128-lane physical row.

    x_ref:  (tm, Dp)  packed input rows (Dp = pack * D)
    w_ref:  (Dp, Dp)  block-diagonal W^T (each block is torch-W transposed),
                      stored in the MXU dtype (bf16 by default)
    s_ref:  (Dp, Dp)  block-diagonal ones (segment-sum matrix), f32
    b_ref, g_ref, bt_ref: (1, Dp)  bias / gamma / beta tiled `pack` times, f32
    """
    x = x_ref[...].astype(jnp.float32)

    # Linear on the MXU: weight is already transposed + block-diagonal, so each
    # D-lane segment gets its own  x_seg @ W^T  via a plain contraction
    # (no in-kernel relayout).  bf16 inputs, f32 accumulation.
    y = jnp.dot(x.astype(w_ref.dtype), w_ref[...],
                preferred_element_type=jnp.float32)
    y = y + b_ref[...]

    # Segmented LayerNorm via the MXU: y @ S broadcasts each segment's sum back
    # to every lane of that segment.  Kept in f32: one-pass variance
    # (var = E[y^2] - mean^2) is cancellation-prone with bf16 sums.
    s = s_ref[...]
    mean = jnp.dot(y, s, preferred_element_type=jnp.float32) * inv_d
    ex2 = jnp.dot(y * y, s, preferred_element_type=jnp.float32) * inv_d
    var = ex2 - mean * mean

    yn = (y - mean) * jax.lax.rsqrt(var + _EPS)
    yn = yn * g_ref[...] + bt_ref[...]

    # ReLU + residual (packing preserves element alignment, so adding the
    # packed x is the correct per-element residual).
    o_ref[...] = (x + jnp.maximum(yn, 0.0)).astype(o_ref.dtype)


def _plain_kernel(x_ref, w_ref, b_ref, g_ref, bt_ref, o_ref, *, inv_d):
    """Un-packed path (in_ch >= 128 or not a divisor of 128)."""
    x = x_ref[...].astype(jnp.float32)
    y = jnp.dot(x.astype(w_ref.dtype), w_ref[...],
                preferred_element_type=jnp.float32)
    y = y + b_ref[...]

    mean = jnp.sum(y, axis=-1, keepdims=True) * inv_d
    ex2 = jnp.sum(y * y, axis=-1, keepdims=True) * inv_d
    var = ex2 - mean * mean

    yn = (y - mean) * jax.lax.rsqrt(var + _EPS)
    yn = yn * g_ref[...] + bt_ref[...]
    o_ref[...] = (x + jnp.maximum(yn, 0.0)).astype(o_ref.dtype)


@functools.partial(jax.jit, static_argnames=("block_rows", "mxu_dtype"))
def linear_resblock(x, w, b, gamma, beta, *, block_rows=1024,
                    mxu_dtype=jnp.bfloat16):
    """out = x + relu(layernorm(x @ w.T + b)).  w: (in_ch, in_ch) torch (out, in)."""
    orig_shape = x.shape
    D = orig_shape[-1]
    x2d = x.reshape(-1, D)
    N = x2d.shape[0]
    f32 = jnp.float32

    # Lane-packing factor: put `pack` logical rows into one 128-lane row.
    pack = 128 // D if (D < 128 and 128 % D == 0) else 1
    Dp = D * pack

    # Pad so logical rows fill an integer number of packed rows (< pack extra
    # rows), then pack via a free contiguous reshape (no data movement).
    pad_n = (-N) % pack
    if pad_n:
        x2d = jnp.pad(x2d, ((0, pad_n), (0, 0)))
    R = x2d.shape[0] // pack
    xp = x2d.reshape(R, Dp)

    # Row tile: as large as block_rows allows, multiple of 8, but aim for
    # >= 8 grid steps on big workloads (>= 4 per v7x TensorCore) so the
    # software pipeline stays fed.  The grid uses cdiv, so tm need not divide
    # R -- the partial last block is handled by Pallas (no wrapper-side pad,
    # no out[:R] slice copy afterwards).
    tm = min(block_rows, max(8, _round_up(pl.cdiv(R, 8), 8)))
    grid = (pl.cdiv(R, tm),)

    # Parameters: built once per call.  Weight is pre-transposed so the kernel
    # contraction is (lane of x) x (sublane of w) — no in-kernel relayout.
    w_t = w.astype(f32).T
    if pack > 1:
        eye = jnp.eye(pack, dtype=f32)
        w_in = jnp.kron(eye, w_t).astype(mxu_dtype)            # block-diag W^T
        s_in = jnp.kron(eye, jnp.ones((D, D), f32))            # segment sums
    else:
        w_in = w_t.astype(mxu_dtype)
        s_in = None
    b_in = jnp.tile(b.astype(f32), pack).reshape(1, Dp)
    g_in = jnp.tile(gamma.astype(f32), pack).reshape(1, Dp)
    bt_in = jnp.tile(beta.astype(f32), pack).reshape(1, Dp)

    row_spec = pl.BlockSpec((tm, Dp), lambda i: (i, 0))
    # Grid-invariant operands (index_map is constant).
    # TODO(synk): pipeline_mode=pl.Buffered(1) to single-buffer these once the
    # large-D / K-tiled path needs the VMEM headroom (negligible at D <= 128).
    mat_spec = pl.BlockSpec((Dp, Dp), lambda i: (0, 0))
    vec_spec = pl.BlockSpec((1, Dp), lambda i: (0, 0))

    if pack > 1:
        kernel = functools.partial(_packed_kernel, inv_d=1.0 / D)
        in_specs = [row_spec, mat_spec, mat_spec, vec_spec, vec_spec, vec_spec]
        args = (xp, w_in, s_in, b_in, g_in, bt_in)
        n_mm = 3
    else:
        kernel = functools.partial(_plain_kernel, inv_d=1.0 / D)
        in_specs = [row_spec, mat_spec, vec_spec, vec_spec, vec_spec]
        args = (xp, w_in, b_in, g_in, bt_in)
        n_mm = 1

    cost = pl.CostEstimate(
        flops=2 * R * Dp * Dp * n_mm + 10 * R * Dp,
        transcendentals=R * Dp,
        bytes_accessed=(x.dtype.itemsize * 2 * R * Dp
                        + n_mm * Dp * Dp * 4 + 3 * Dp * 4),
    )

    out = pl.pallas_call(
        kernel,
        out_shape=jax.ShapeDtypeStruct((R, Dp), x.dtype),
        grid=grid,
        in_specs=in_specs,
        out_specs=row_spec,
        compiler_params=pltpu.CompilerParams(
            dimension_semantics=("parallel",)),
        cost_estimate=cost,
    )(*args)

    # Undo packing (free contiguous reshape) and the tiny pack padding.
    out = out.reshape(R * pack, D)
    if pad_n:
        out = out[:N]
    return out.reshape(orig_shape)


def _reference(x, w, b, gamma, beta):
    y = jnp.einsum("...i,oi->...o", x, w) + b
    mean = jnp.mean(y, axis=-1, keepdims=True)
    var = jnp.mean((y - mean) ** 2, axis=-1, keepdims=True)
    yn = (y - mean) / jnp.sqrt(var + _EPS) * gamma + beta
    return x + jnp.maximum(yn, 0.0)


if __name__ == "__main__":
    key = jax.random.PRNGKey(0)
    batch, seq, in_ch = 2, 8, 32          # Linear_ResBlock(in_ch=32), x: (2, 8, 32)

    k_x, k_w, k_b, k_g, k_be, k_x2 = jax.random.split(key, 6)
    x = jax.random.normal(k_x, (batch, seq, in_ch), dtype=jnp.float32)

    # Deterministic synthetic "init" of the module parameters (not a checkpoint).
    bound = 1.0 / (in_ch ** 0.5)
    w = jax.random.uniform(k_w, (in_ch, in_ch), minval=-bound, maxval=bound,
                           dtype=jnp.float32)          # nn.Linear weight (out, in)
    b = jax.random.uniform(k_b, (in_ch,), minval=-bound, maxval=bound,
                           dtype=jnp.float32)          # nn.Linear bias
    gamma = jnp.ones((in_ch,), jnp.float32) + 0.01 * jax.random.normal(k_g, (in_ch,))
    beta = 0.01 * jax.random.normal(k_be, (in_ch,))

    ref = _reference(x, w, b, gamma, beta)

    # Default path: bf16 MXU inputs, f32 accumulation / elementwise chain.
    out = linear_resblock(x, w, b, gamma, beta)
    jax.block_until_ready(out)
    assert out.shape == x.shape and out.dtype == x.dtype
    assert jnp.allclose(out, ref, atol=5e-2, rtol=5e-2), \
        float(jnp.max(jnp.abs(out - ref)))

    # Exact-structure check: f32 MXU path must match the reference tightly.
    out_f32 = linear_resblock(x, w, b, gamma, beta, mxu_dtype=jnp.float32)
    jax.block_until_ready(out_f32)
    assert jnp.allclose(out_f32, ref, atol=1e-4, rtol=1e-4), \
        float(jnp.max(jnp.abs(out_f32 - ref)))

    # Row count not a multiple of the packing factor (exercises the tiny pad).
    x2 = jax.random.normal(k_x2, (3, 5, in_ch), dtype=jnp.float32)
    out2 = linear_resblock(x2, w, b, gamma, beta, mxu_dtype=jnp.float32)
    jax.block_until_ready(out2)
    assert jnp.allclose(out2, _reference(x2, w, b, gamma, beta),
                        atol=1e-4, rtol=1e-4)

    # pack == 1 path (in_ch = 128): plain cross-lane LayerNorm reduction with a
    # partial last row block (R = 52, tm = 8 -> 7 grid steps, last one ragged).
    in_ch2 = 128
    k_w2, k_b2 = jax.random.split(k_w)
    bound2 = 1.0 / (in_ch2 ** 0.5)
    w2 = jax.random.uniform(k_w2, (in_ch2, in_ch2), minval=-bound2,
                            maxval=bound2, dtype=jnp.float32)
    b2 = jax.random.uniform(k_b2, (in_ch2,), minval=-bound2, maxval=bound2,
                            dtype=jnp.float32)
    g2 = jnp.ones((in_ch2,), jnp.float32)
    be2 = jnp.zeros((in_ch2,), jnp.float32)
    x3 = jax.random.normal(k_x, (4, 13, in_ch2), dtype=jnp.float32)
    out3 = linear_resblock(x3, w2, b2, g2, be2, mxu_dtype=jnp.float32)
    jax.block_until_ready(out3)
    assert jnp.allclose(out3, _reference(x3, w2, b2, g2, be2),
                        atol=1e-4, rtol=1e-4)

    print("KERNEL_OK")
</pallas_src>

<mosaic_0001>
module attributes {stable_mosaic.version = 11 : i64} {
  func.func @_packed_kernel(%arg0: i32, %arg1: memref<8x128xf32, #tpu.memory_space<vmem>>, %arg2: memref<128x128xbf16, #tpu.memory_space<vmem>>, %arg3: memref<128x128xf32, #tpu.memory_space<vmem>>, %arg4: memref<1x128xf32, #tpu.memory_space<vmem>>, %arg5: memref<1x128xf32, #tpu.memory_space<vmem>>, %arg6: memref<1x128xf32, #tpu.memory_space<vmem>>, %arg7: memref<8x128xf32, #tpu.memory_space<vmem>>) attributes {dimension_semantics = [#tpu.dimension_semantics<parallel>], iteration_bounds = array<i64: 1>, scalar_prefetch = 0 : i64, scratch_operands = 0 : i64, tpu.core_type = #tpu.core_type<tc>, window_params = [{transform_indices = @transform_0, window_bounds = array<i64: 8, 128>}, {pipeline_mode = #tpu.pipeline_mode<synchronous>, transform_indices = @transform_1, window_bounds = array<i64: 128, 128>}, {pipeline_mode = #tpu.pipeline_mode<synchronous>, transform_indices = @transform_2, window_bounds = array<i64: 128, 128>}, {pipeline_mode = #tpu.pipeline_mode<synchronous>, transform_indices = @transform_3, window_bounds = array<i64: 1, 128>}, {pipeline_mode = #tpu.pipeline_mode<synchronous>, transform_indices = @transform_4, window_bounds = array<i64: 1, 128>}, {pipeline_mode = #tpu.pipeline_mode<synchronous>, transform_indices = @transform_5, window_bounds = array<i64: 1, 128>}, {transform_indices = @transform_6, window_bounds = array<i64: 8, 128>}]} {
    %c0 = arith.constant 0 : index
    %c0_0 = arith.constant 0 : index
    %0 = vector.load %arg1[%c0, %c0_0] : memref<8x128xf32, #tpu.memory_space<vmem>>, vector<8x128xf32>
    %1 = arith.truncf %0 : vector<8x128xf32> to vector<8x128xbf16>
    %c0_1 = arith.constant 0 : index
    %c0_2 = arith.constant 0 : index
    %2 = vector.load %arg2[%c0_1, %c0_2] : memref<128x128xbf16, #tpu.memory_space<vmem>>, vector<128x128xbf16>
    %cst = arith.constant dense<0.000000e+00> : vector<8x128xf32>
    %3 = tpu.matmul %1, %2, %cst {dimension_numbers = #tpu.dot_dimension_numbers<[1], [0], [0], [1], [0, 0, 1, 1], [], []>} : vector<8x128xbf16>, vector<128x128xbf16>, vector<8x128xf32> -> vector<8x128xf32>
    %c0_3 = arith.constant 0 : index
    %c0_4 = arith.constant 0 : index
    %4 = vector.load %arg4[%c0_3, %c0_4] : memref<1x128xf32, #tpu.memory_space<vmem>>, vector<1x128xf32>
    %5 = vector.broadcast %4 : vector<1x128xf32> to vector<8x128xf32>
    %6 = arith.addf %3, %5 : vector<8x128xf32>
    %c0_5 = arith.constant 0 : index
    %c0_6 = arith.constant 0 : index
    %7 = vector.load %arg3[%c0_5, %c0_6] : memref<128x128xf32, #tpu.memory_space<vmem>>, vector<128x128xf32>
    %cst_7 = arith.constant dense<0.000000e+00> : vector<8x128xf32>
    %8 = tpu.matmul %6, %7, %cst_7 {dimension_numbers = #tpu.dot_dimension_numbers<[1], [0], [0], [1], [0, 0, 1, 1], [], []>} : vector<8x128xf32>, vector<128x128xf32>, vector<8x128xf32> -> vector<8x128xf32>
    %cst_8 = arith.constant 3.125000e-02 : f32
    %9 = vector.broadcast %cst_8 : f32 to vector<8x128xf32>
    %10 = arith.mulf %8, %9 : vector<8x128xf32>
    %11 = arith.mulf %6, %6 : vector<8x128xf32>
    %cst_9 = arith.constant dense<0.000000e+00> : vector<8x128xf32>
    %12 = tpu.matmul %11, %7, %cst_9 {dimension_numbers = #tpu.dot_dimension_numbers<[1], [0], [0], [1], [0, 0, 1, 1], [], []>} : vector<8x128xf32>, vector<128x128xf32>, vector<8x128xf32> -> vector<8x128xf32>
    %cst_10 = arith.constant 3.125000e-02 : f32
    %13 = vector.broadcast %cst_10 : f32 to vector<8x128xf32>
    %14 = arith.mulf %12, %13 : vector<8x128xf32>
    %15 = arith.mulf %10, %10 : vector<8x128xf32>
    %16 = arith.subf %14, %15 : vector<8x128xf32>
    %17 = arith.subf %6, %10 : vector<8x128xf32>
    %cst_11 = arith.constant 9.99999974E-6 : f32
    %18 = vector.broadcast %cst_11 : f32 to vector<8x128xf32>
    %19 = arith.addf %16, %18 : vector<8x128xf32>
    %20 = math.rsqrt %19 : vector<8x128xf32>
    %21 = arith.mulf %17, %20 : vector<8x128xf32>
    %c0_12 = arith.constant 0 : index
    %c0_13 = arith.constant 0 : index
    %22 = vector.load %arg5[%c0_12, %c0_13] : memref<1x128xf32, #tpu.memory_space<vmem>>, vector<1x128xf32>
    %23 = vector.broadcast %22 : vector<1x128xf32> to vector<8x128xf32>
    %24 = arith.mulf %21, %23 : vector<8x128xf32>
    %c0_14 = arith.constant 0 : index
    %c0_15 = arith.constant 0 : index
    %25 = vector.load %arg6[%c0_14, %c0_15] : memref<1x128xf32, #tpu.memory_space<vmem>>, vector<1x128xf32>
    %26 = vector.broadcast %25 : vector<1x128xf32> to vector<8x128xf32>
    %27 = arith.addf %24, %26 : vector<8x128xf32>
    %cst_16 = arith.constant 0.000000e+00 : f32
    %28 = vector.broadcast %cst_16 : f32 to vector<8x128xf32>
    %29 = arith.maximumf %27, %28 : vector<8x128xf32>
    %30 = arith.addf %0, %29 : vector<8x128xf32>
    %c0_17 = arith.constant 0 : index
    %c0_18 = arith.constant 0 : index
    %31 = vector.load %arg7[%c0_17, %c0_18] : memref<8x128xf32, #tpu.memory_space<vmem>>, vector<8x128xf32>
    tpu.vector_store %arg7[%c0_17, %c0_18], %30 {strides = array<i32>} : memref<8x128xf32, #tpu.memory_space<vmem>>, vector<8x128xf32>,
    return
  }
  func.func @transform_0(%arg0: i32) -> (i32, i32) {
    %c0_i32 = arith.constant 0 : i32
    %c0_i32_0 = arith.constant 0 : i32
    return %arg0, %c0_i32 : i32, i32
  }
  func.func @transform_1(%arg0: i32) -> (i32, i32) {
    %c0_i32 = arith.constant 0 : i32
    %c0_i32_0 = arith.constant 0 : i32
    %c0_i32_1 = arith.constant 0 : i32
    return %c0_i32, %c0_i32_0 : i32, i32
  }
  func.func @transform_2(%arg0: i32) -> (i32, i32) {
    %c0_i32 = arith.constant 0 : i32
    %c0_i32_0 = arith.constant 0 : i32
    %c0_i32_1 = arith.constant 0 : i32
    return %c0_i32, %c0_i32_0 : i32, i32
  }
  func.func @transform_3(%arg0: i32) -> (i32, i32) {
    %c0_i32 = arith.constant 0 : i32
    %c0_i32_0 = arith.constant 0 : i32
    %c0_i32_1 = arith.constant 0 : i32
    return %c0_i32, %c0_i32_0 : i32, i32
  }
  func.func @transform_4(%arg0: i32) -> (i32, i32) {
    %c0_i32 = arith.constant 0 : i32
    %c0_i32_0 = arith.constant 0 : i32
    %c0_i32_1 = arith.constant 0 : i32
    return %c0_i32, %c0_i32_0 : i32, i32
  }
  func.func @transform_5(%arg0: i32) -> (i32, i32) {
    %c0_i32 = arith.constant 0 : i32
    %c0_i32_0 = arith.constant 0 : i32
    %c0_i32_1 = arith.constant 0 : i32
    return %c0_i32, %c0_i32_0 : i32, i32
  }
  func.func @transform_6(%arg0: i32) -> (i32, i32) {
    %c0_i32 = arith.constant 0 : i32
    %c0_i32_0 = arith.constant 0 : i32
    return %arg0, %c0_i32 : i32, i32
  }
}

</mosaic_0001>

<llo_original>
// kernel: tile.18
$region0: #{tile.18}
  #allocation0 [shape = 's32[1]{0}', space=sflag, size = 0x4, scoped, tag = 'scoped memory for tile.18']
  %s0 = inlined_call_operand.vmem [shape: f32[32], index: 0, kind: input, shape index: {}]
  %s1 = inlined_call_operand.vmem [shape: f32[4,32], index: 1, kind: output, shape index: {}]
  // Predicated region
  $region2: #{tile.18} parent=0 // pred_check
    _
  $region3: #{tile.18} parent=0 // pred_check_branch
    %3 = sbr.rel (0) target = $region5
  $region4: #{tile.18} parent=0 // pred_region
    _
  $region5: #{tile.18} parent=0 // pred_fallthru
    _
  %v4 = vld [vmem:[%s0] ss:$0 sm:$0xff]
  %5 = vst [vmem:[%s1] sm:$0xf] %v4

// kernel: tile.19
$region0: #{tile.19}
  %s0 = inlined_call_operand.vmem [shape: f32[4,32], index: 0, kind: input, shape index: {}]
  %s1 = inlined_call_operand.vmem [shape: f32[1,128], index: 1, kind: output, shape index: {}]
  $region1: #{tile.19} parent=0
    #allocation0 [shape = 'u8[4096]{0}', space=vmem, size = 0x1000, scoped, tag = 'scoped mem for output reshape']
    #allocation1 [shape = 'u8[4096]{0}', space=vmem, size = 0x1000, scoped, tag = 'scoped mem for input reshape']
    %s3 = sshll.u32 1, 4
    %s4 = ssub.s32 %s3, 1
    %v5 = vld [vmem:[%s0] sm:%s4]
    %6 = vst [vmem:[#allocation1] sm:%s4] %v5
    %v7 = vld [vmem:[#allocation1] sm:$0x1]
    %vm8 = vcmask 261120
    %9 = vst.msk [vmem:[#allocation0] sm:$0x1] %vm8, %v7
    %s10 = scalar_lea.vmem [#allocation1], 3
    %v11 = vld [vmem:[%s10] sm:$0x1]
    %12 = vrot.lane.b32.xlu0 %v11, 96
    %v13 = vpop.permute.xlu0 %12
    %vm14 = vcmask 1048320
    %15 = vst.msk [vmem:[#allocation0] sm:$0x1] %vm14, %v13
    %s16 = scalar_lea.vmem [#allocation1], 2
    %v17 = vld [vmem:[%s16] sm:$0x1]
    %18 = vrot.lane.b32.xlu0 %v17, 64
    %v19 = vpop.permute.xlu0 %18
    %vm20 = vcmask 785920
    %21 = vst.msk [vmem:[#allocation0] sm:$0x1] %vm20, %v19
    %s22 = scalar_lea.vmem [#allocation1], 1
    %v23 = vld [vmem:[%s22] sm:$0x1]
    %24 = vrot.lane.b32.xlu0 %v23, 32
    %v25 = vpop.permute.xlu0 %24
    %vm26 = vcmask 523520
    %27 = vst.msk [vmem:[#allocation0] sm:$0x1] %vm26, %v25
    %s29 = sshll.u32 1, 1
    %s30 = ssub.s32 %s29, 1
    %v32 = vld [vmem:[#allocation0] sm:%s30]
    %s33 = sshll.u32 1, 1
    %s34 = ssub.s32 %s33, 1
    %35 = vst [vmem:[%s1] sm:%s34] %v32

// kernel: linear_resblock.1
$region0: #{linear_resblock.1}
  #allocation0 [shape = 'u32[]', space=smem, size = 0x4, offset = 0x4, fixed_abs, tag = 'smem constant byte address 0x4 - core index']
  #allocation1 [shape = 'u32[144,128]{1,0:T(1,128)}', space=vmem, size = 0x12000, scoped, tag = 'internal scratch']
  %s0 = inlined_call_operand.vmem [shape: f32[4,128], index: 0, kind: input, shape index: {}]
  %s1 = inlined_call_operand.vmem [shape: bf16[128,128], index: 1, kind: input, shape index: {}]
  %s2 = inlined_call_operand.vmem [shape: f32[128,128], index: 2, kind: input, shape index: {}]
  %s3 = inlined_call_operand.vmem [shape: f32[1,128], index: 3, kind: input, shape index: {}]
  %s4 = inlined_call_operand.vmem [shape: f32[1,128], index: 4, kind: input, shape index: {}]
  %s5 = inlined_call_operand.vmem [shape: f32[1,128], index: 5, kind: input, shape index: {}]
  %s6 = inlined_call_operand.vmem [shape: f32[4,128], index: 6, kind: output, shape index: {}]
  %s7 = sld [smem:[#allocation0]]
  $region64: #{linear_resblock.1} parent=0
    _
  %s9 = ssub.s32 1, %s7
  %s10 = scalar_select 0, %s9, %s7
  $region1: #{linear_resblock.1} parent=0
    #allocation2 [shape = 'u8[4096]{0}', space=vmem, size = 0x1000, scoped, tag = 'output window, operand 0, single buffered']
    // Predicated region
    $region2: #{linear_resblock.1} parent=1 // pred_check
      _
    $region3: #{linear_resblock.1} parent=1 // pred_check_branch
      %12 = sbr.rel (0) target = $region5
    $region4: #{linear_resblock.1} parent=1 // pred_region
      _
    $region5: #{linear_resblock.1} parent=1 // pred_fallthru
      _
    // Predicated region
    $region6: #{linear_resblock.1} parent=1 // pred_check
      _
    $region7: #{linear_resblock.1} parent=1 // pred_check_branch
      %14 = sbr.rel (0) target = $region9
    $region8: #{linear_resblock.1} parent=1 // pred_region
      _
    $region9: #{linear_resblock.1} parent=1 // pred_fallthru
      _
    // Predicated region
    $region10: #{linear_resblock.1} parent=1 // pred_check
      _
    $region11: #{linear_resblock.1} parent=1 // pred_check_branch
      %16 = sbr.rel (0) target = $region13
    $region12: #{linear_resblock.1} parent=1 // pred_region
      _
    $region13: #{linear_resblock.1} parent=1 // pred_fallthru
      _
    // Predicated region
    $region14: #{linear_resblock.1} parent=1 // pred_check
      _
    $region15: #{linear_resblock.1} parent=1 // pred_check_branch
      %18 = sbr.rel (0) target = $region17
    $region16: #{linear_resblock.1} parent=1 // pred_region
      _
    $region17: #{linear_resblock.1} parent=1 // pred_fallthru
      _
    // Predicated region
    $region18: #{linear_resblock.1} parent=1 // pred_check
      _
    $region19: #{linear_resblock.1} parent=1 // pred_check_branch
      %20 = sbr.rel (0) target = $region21
    $region20: #{linear_resblock.1} parent=1 // pred_region
      _
    $region21: #{linear_resblock.1} parent=1 // pred_fallthru
      _
    // Predicated region
    $region22: #{linear_resblock.1} parent=1 // pred_check
      _
    $region23: #{linear_resblock.1} parent=1 // pred_check_branch
      %22 = sbr.rel (0) target = $region25
    $region24: #{linear_resblock.1} parent=1 // pred_region
      _
    $region25: #{linear_resblock.1} parent=1 // pred_fallthru
      _
    %v24 = vld [vmem:[%s0] sm:$0xff]
    %v25 = vpack.c.bf16 %v24, %v24
    %v26 = vld [vmem:[%s1] sm:$0xf]
    %v27 = vld [vmem:[%s1 + $0x4] sm:$0xf]
    %v28 = vld [vmem:[%s1 + $0x8] sm:$0xf]
    %v29 = vld [vmem:[%s1 + $0xc] sm:$0xf]
    %v30 = vld [vmem:[%s1 + $0x10] sm:$0xf]
    %v31 = vld [vmem:[%s1 + $0x14] sm:$0xf]
    %v32 = vld [vmem:[%s1 + $0x18] sm:$0xf]
    %v33 = vld [vmem:[%s1 + $0x1c] sm:$0xf]
    %v34 = vld [vmem:[%s1 + $0x20] sm:$0xf]
    %v35 = vld [vmem:[%s1 + $0x24] sm:$0xf]
    %v36 = vld [vmem:[%s1 + $0x28] sm:$0xf]
    %v37 = vld [vmem:[%s1 + $0x2c] sm:$0xf]
    %v38 = vld [vmem:[%s1 + $0x30] sm:$0xf]
    %v39 = vld [vmem:[%s1 + $0x34] sm:$0xf]
    %v40 = vld [vmem:[%s1 + $0x38] sm:$0xf]
    %v41 = vld [vmem:[%s1 + $0x3c] sm:$0xf]
    %v42 = vld [vmem:[%s3] sm:$0x1]
    %v44 = vlaneseq
    %v45 = vshrl.u32 %v44, 7
    %v46 = vsub.s32 0, %v45
    %v47 = vrot.slane %v42, %v46
    %v65 = vunpack.c.l.b16 %v26
    %v66 = vunpack.c.l.b16 %v27
    %v67 = vunpack.c.l.b16 %v28
    %v68 = vunpack.c.l.b16 %v29
    %v69 = vunpack.c.l.b16 %v30
    %v70 = vunpack.c.l.b16 %v31
    %v71 = vunpack.c.l.b16 %v32
    %v72 = vunpack.c.l.b16 %v33
    %v73 = vunpack.c.l.b16 %v34
    %v74 = vunpack.c.l.b16 %v35
    %v75 = vunpack.c.l.b16 %v36
    %v76 = vunpack.c.l.b16 %v37
    %v77 = vunpack.c.l.b16 %v38
    %v78 = vunpack.c.l.b16 %v39
    %v79 = vunpack.c.l.b16 %v40
    %v80 = vunpack.c.l.b16 %v41
    %v81 = vpack.c.b16 %v66, %v65
    %v82 = vpack.c.b16 %v68, %v67
    %v83 = vpack.c.b16 %v70, %v69
    %v84 = vpack.c.b16 %v72, %v71
    %v85 = vpack.c.b16 %v74, %v73
    %v86 = vpack.c.b16 %v76, %v75
    %v87 = vpack.c.b16 %v78, %v77
    %v88 = vpack.c.b16 %v80, %v79
    %97 = vmatprep.subr.bf16.mxu0 0
    %98 = vmatpush1.bf16.msra.mxu0 %v88
    %99 = vmatprep.subr.bf16.mxu0 0
    %100 = vmatpush1.bf16.msra.mxu0 %v87
    %101 = vmatprep.subr.bf16.mxu0 0
    %102 = vmatpush1.bf16.msra.mxu0 %v86
    %103 = vmatprep.subr.bf16.mxu0 0
    %104 = vmatpush1.bf16.msra.mxu0 %v85
    %105 = vmatprep.subr.bf16.mxu0 0
    %106 = vmatpush1.bf16.msra.mxu0 %v84
    %107 = vmatprep.subr.bf16.mxu0 0
    %108 = vmatpush1.bf16.msra.mxu0 %v83
    %109 = vmatprep.subr.bf16.mxu0 0
    %110 = vmatpush1.bf16.msra.mxu0 %v82
    %111 = vmatprep.subr.bf16.mxu0 0
    %112 = vmatpush1.bf16.msra.mxu0 %v81
    %113 = vmatprep.subr.bf16.mxu0 0
    %114 = vmatpush2.bf16.msra.mxu0 0
    %115 = vmatprep.subr.bf16.mxu0 0
    %116 = vmatpush2.bf16.msra.mxu0 0
    %117 = vmatprep.subr.bf16.mxu0 0
    %118 = vmatpush2.bf16.msra.mxu0 0
    %119 = vmatprep.subr.bf16.mxu0 0
    %120 = vmatpush2.bf16.msra.mxu0 0
    %121 = vmatprep.subr.bf16.mxu0 0
    %122 = vmatpush2.bf16.msra.mxu0 0
    %123 = vmatprep.subr.bf16.mxu0 0
    %124 = vmatpush2.bf16.msra.mxu0 0
    %125 = vmatprep.subr.bf16.mxu0 0
    %126 = vmatpush2.bf16.msra.mxu0 0
    %127 = vmatprep.subr.bf16.mxu0 0
    %128 = vmatpush2.bf16.msra.mxu0 0
    %129 = vmatprep.mubr.bf16.mxu0 0
    %130 = vmatmul.mubr.bf16.gmra.mxu0 %v25
    %v131 = vpop.f32.mrf.mxu0
    %v132 = vadd.f32 %v47, %v131
    %v133 = vpop.f32.mrf.mxu0
    %v134 = vpop.f32.mrf.mxu0
    %v135 = vpop.f32.mrf.mxu0
    %136 = vdwg.mxu0
    %v137 = vld [vmem:[%s2] sm:$0xff]
    %v138 = vld [vmem:[%s2 + $0x8] sm:$0xff]
    %v139 = vld [vmem:[%s2 + $0x10] sm:$0xff]
    %v140 = vld [vmem:[%s2 + $0x18] sm:$0xff]
    %v141 = vld [vmem:[%s2 + $0x20] sm:$0xff]
    %v142 = vld [vmem:[%s2 + $0x28] sm:$0xff]
    %v143 = vld [vmem:[%s2 + $0x30] sm:$0xff]
    %v144 = vld [vmem:[%s2 + $0x38] sm:$0xff]
    %v145 = vld [vmem:[%s2 + $0x40] sm:$0xff]
    %v146 = vld [vmem:[%s2 + $0x48] sm:$0xff]
    %v147 = vld [vmem:[%s2 + $0x50] sm:$0xff]
    %v148 = vld [vmem:[%s2 + $0x58] sm:$0xff]
    %v149 = vld [vmem:[%s2 + $0x60] sm:$0xff]
    %v150 = vld [vmem:[%s2 + $0x68] sm:$0xff]
    %v151 = vld [vmem:[%s2 + $0x70] sm:$0xff]
    %v152 = vld [vmem:[%s2 + $0x78] sm:$0xff]
    %153 = vmatprep.subr.mxu0 0.0
    %154 = vmatpush1.msra.mxu0 %v152
    %155 = vmatprep.subr.mxu0 0.0
    %156 = vmatpush1.msra.mxu0 %v151
    %157 = vmatprep.subr.mxu0 0.0
    %158 = vmatpush1.msra.mxu0 %v150
    %159 = vmatprep.subr.mxu0 0.0
    %160 = vmatpush1.msra.mxu0 %v149
    %161 = vmatprep.subr.mxu0 0.0
    %162 = vmatpush1.msra.mxu0 %v148
    %163 = vmatprep.subr.mxu0 0.0
    %164 = vmatpush1.msra.mxu0 %v147
    %165 = vmatprep.subr.mxu0 0.0
    %166 = vmatpush1.msra.mxu0 %v146
    %167 = vmatprep.subr.mxu0 0.0
    %168 = vmatpush1.msra.mxu0 %v145
    %169 = vmatprep.subr.mxu0 0.0
    %170 = vmatpush1.msra.mxu0 %v144
    %171 = vmatprep.subr.mxu0 0.0
    %172 = vmatpush1.msra.mxu0 %v143
    %173 = vmatprep.subr.mxu0 0.0
    %174 = vmatpush1.msra.mxu0 %v142
    %175 = vmatprep.subr.mxu0 0.0
    %176 = vmatpush1.msra.mxu0 %v141
    %177 = vmatprep.subr.mxu0 0.0
    %178 = vmatpush1.msra.mxu0 %v140
    %179 = vmatprep.subr.mxu0 0.0
    %180 = vmatpush1.msra.mxu0 %v139
    %181 = vmatprep.subr.mxu0 0.0
    %182 = vmatpush1.msra.mxu0 %v138
    %183 = vmatprep.subr.mxu0 0.0
    %184 = vmatpush1.msra.mxu0 %v137
    %185 = vmatprep.subr.mxu0 0.0
    %186 = vmatpush2.msra.mxu0 0.0
    %187 = vmatprep.subr.mxu0 0.0
    %188 = vmatpush2.msra.mxu0 0.0
    %189 = vmatprep.subr.mxu0 0.0
    %190 = vmatpush2.msra.mxu0 0.0
    %191 = vmatprep.subr.mxu0 0.0
    %192 = vmatpush2.msra.mxu0 0.0
    %193 = vmatprep.subr.mxu0 0.0
    %194 = vmatpush2.msra.mxu0 0.0
    %195 = vmatprep.subr.mxu0 0.0
    %196 = vmatpush2.msra.mxu0 0.0
    %197 = vmatprep.subr.mxu0 0.0
    %198 = vmatpush2.msra.mxu0 0.0
    %199 = vmatprep.subr.mxu0 0.0
    %200 = vmatpush2.msra.mxu0 0.0
    %201 = vmatprep.subr.mxu0 0.0
    %202 = vmatpush2.msra.mxu0 0.0
    %203 = vmatprep.subr.mxu0 0.0
    %204 = vmatpush2.msra.mxu0 0.0
    %205 = vmatprep.subr.mxu0 0.0
    %206 = vmatpush2.msra.mxu0 0.0
    %207 = vmatprep.subr.mxu0 0.0
    %208 = vmatpush2.msra.mxu0 0.0
    %209 = vmatprep.subr.mxu0 0.0
    %210 = vmatpush2.msra.mxu0 0.0
    %211 = vmatprep.subr.mxu0 0.0
    %212 = vmatpush2.msra.mxu0 0.0
    %213 = vmatprep.subr.mxu0 0.0
    %214 = vmatpush2.msra.mxu0 0.0
    %215 = vmatprep.subr.mxu0 0.0
    %216 = vmatpush2.msra.mxu0 0.0
    %217 = vmatprep.mubr.f32.mxu0 0.0
    %218 = vmatmul.mubr.f32.gmra.mxu0 %v132
    %v219 = vpop.f32.mrf.mxu0
    %v220 = vadd.f32 0.0, %v219
    %v221 = vpop.f32.mrf.mxu0
    %222 = vdwg.mxu0
    %v223 = vmul.f32 %v220, 0.03125
    %v224 = vmul.f32 %v132, %v132
    %225 = vmatprep.subr.mxu0 0.0
    %226 = vmatpush1.msra.mxu0 %v152
    %227 = vmatprep.subr.mxu0 0.0
    %228 = vmatpush1.msra.mxu0 %v151
    %229 = vmatprep.subr.mxu0 0.0
    %230 = vmatpush1.msra.mxu0 %v150
    %231 = vmatprep.subr.mxu0 0.0
    %232 = vmatpush1.msra.mxu0 %v149
    %233 = vmatprep.subr.mxu0 0.0
    %234 = vmatpush1.msra.mxu0 %v148
    %235 = vmatprep.subr.mxu0 0.0
    %236 = vmatpush1.msra.mxu0 %v147
    %237 = vmatprep.subr.mxu0 0.0
    %238 = vmatpush1.msra.mxu0 %v146
    %239 = vmatprep.subr.mxu0 0.0
    %240 = vmatpush1.msra.mxu0 %v145
    %241 = vmatprep.subr.mxu0 0.0
    %242 = vmatpush1.msra.mxu0 %v144
    %243 = vmatprep.subr.mxu0 0.0
    %244 = vmatpush1.msra.mxu0 %v143
    %245 = vmatprep.subr.mxu0 0.0
    %246 = vmatpush1.msra.mxu0 %v142
    %247 = vmatprep.subr.mxu0 0.0
    %248 = vmatpush1.msra.mxu0 %v141
    %249 = vmatprep.subr.mxu0 0.0
    %250 = vmatpush1.msra.mxu0 %v140
    %251 = vmatprep.subr.mxu0 0.0
    %252 = vmatpush1.msra.mxu0 %v139
    %253 = vmatprep.subr.mxu0 0.0
    %254 = vmatpush1.msra.mxu0 %v138
    %255 = vmatprep.subr.mxu0 0.0
    %256 = vmatpush1.msra.mxu0 %v137
    %257 = vmatprep.subr.mxu0 0.0
    %258 = vmatpush2.msra.mxu0 0.0
    %259 = vmatprep.subr.mxu0 0.0
    %260 = vmatpush2.msra.mxu0 0.0
    %261 = vmatprep.subr.mxu0 0.0
    %262 = vmatpush2.msra.mxu0 0.0
    %263 = vmatprep.subr.mxu0 0.0
    %264 = vmatpush2.msra.mxu0 0.0
    %265 = vmatprep.subr.mxu0 0.0
    %266 = vmatpush2.msra.mxu0 0.0
    %267 = vmatprep.subr.mxu0 0.0
    %268 = vmatpush2.msra.mxu0 0.0
    %269 = vmatprep.subr.mxu0 0.0
    %270 = vmatpush2.msra.mxu0 0.0
    %271 = vmatprep.subr.mxu0 0.0
    %272 = vmatpush2.msra.mxu0 0.0
    %273 = vmatprep.subr.mxu0 0.0
    %274 = vmatpush2.msra.mxu0 0.0
    %275 = vmatprep.subr.mxu0 0.0
    %276 = vmatpush2.msra.mxu0 0.0
    %277 = vmatprep.subr.mxu0 0.0
    %278 = vmatpush2.msra.mxu0 0.0
    %279 = vmatprep.subr.mxu0 0.0
    %280 = vmatpush2.msra.mxu0 0.0
    %281 = vmatprep.subr.mxu0 0.0
    %282 = vmatpush2.msra.mxu0 0.0
    %283 = vmatprep.subr.mxu0 0.0
    %284 = vmatpush2.msra.mxu0 0.0
    %285 = vmatprep.subr.mxu0 0.0
    %286 = vmatpush2.msra.mxu0 0.0
    %287 = vmatprep.subr.mxu0 0.0
    %288 = vmatpush2.msra.mxu0 0.0
    %289 = vmatprep.mubr.f32.mxu0 0.0
    %290 = vmatmul.mubr.f32.gmra.mxu0 %v224
    %v291 = vpop.f32.mrf.mxu0
    %v292 = vadd.f32 0.0, %v291
    %v293 = vpop.f32.mrf.mxu0
    %294 = vdwg.mxu0
    %v295 = vmul.f32 %v292, 0.03125
    %v296 = vmul.f32 %v223, %v223
    %v297 = vsub.f32 %v295, %v296
    %v298 = vsub.f32 %v132, %v223
    %v299 = vadd.f32 %v297, 1e-05
    %v300 = vrsqrt.pop %v299
    %v301 = vmul.f32 %v298, %v300
    %v302 = vld [vmem:[%s4] sm:$0x1]
    %v304 = vlaneseq
    %v305 = vshrl.u32 %v304, 7
    %v306 = vsub.s32 0, %v305
    %v307 = vrot.slane %v302, %v306
    %v309 = vmul.f32 %v301, %v307
    %v310 = vld [vmem:[%s5] sm:$0x1]
    %v312 = vlaneseq
    %v313 = vshrl.u32 %v312, 7
    %v314 = vsub.s32 0, %v313
    %v315 = vrot.slane %v310, %v314
    %v317 = vadd.f32 %v309, %v315
    %v318 = vmax.f32 %v317, 0.0
    %v319 = vadd.f32 %v24, %v318
    %320 = vst [vmem:[#allocation2] sm:$0xff] %v319
    // Predicated region
    $region26: #{linear_resblock.1} parent=1 // pred_check
      _
    $region27: #{linear_resblock.1} parent=1 // pred_check_branch
      %322 = sbr.rel (0) target = $region29
    $region28: #{linear_resblock.1} parent=1 // pred_region
      // Predicated region
      $region30: #{linear_resblock.1} parent=28 // pred_check
        _
      $region31: #{linear_resblock.1} parent=28 // pred_check_branch
        %324 = sbr.rel (0) target = $region33
      $region32: #{linear_resblock.1} parent=28 // pred_region
        // Predicated region
        $region34: #{linear_resblock.1} parent=32 // pred_check
          _
        $region35: #{linear_resblock.1} parent=32 // pred_check_branch
          %326 = sbr.rel target = $region37
        $region36: #{linear_resblock.1} parent=32 // pred_region
          // Predicated region
          $region49: #{linear_resblock.1} parent=36 // pred_check
            _
          $region50: #{linear_resblock.1} parent=36 // pred_check_branch
            %342 = sbr.rel (0) target = $region52
          $region51: #{linear_resblock.1} parent=36 // pred_region
            %s344 = ssub.s32 16, 1
            loop: start=0, step=1, limit=1
            $region53: #{linear_resblock.1} parent=51 // loop_pre_header
              _
            $region54: #{linear_resblock.1} parent=51 // loop_header
              %s346 = sphi 0, %s350
              %p347 = scmp.ge.s32.totalorder %s346, 1
              %s351 = sphi [#allocation2], [#allocation2]
              %s352 = sphi %s6, %s6
            $region55: #{linear_resblock.1} parent=51 // loop_header_branch
              %349 = sbr.rel (%p347) target = $region59
            $region56: #{linear_resblock.1} parent=51 // loop_body
              %v353 = vld [vmem:[%s351] sm:%s344]
              %354 = vst [vmem:[%s352] sm:%s344] %v353
            $region57: #{linear_resblock.1} parent=51 // loop_footer
              %s350 = sadd.s32 1, %s346
            $region58: #{linear_resblock.1} parent=51 // loop_footer_branch
              %345 = sbr.rel target = $region54
            $region59: #{linear_resblock.1} parent=51 // loop_exit
              _
          $region52: #{linear_resblock.1} parent=36 // pred_fallthru
            _
        $region37: #{linear_resblock.1} parent=32 // pred_fallthru
          _
        // Predicated region
        $region38: #{linear_resblock.1} parent=32 // pred_check
          _
        $region39: #{linear_resblock.1} parent=32 // pred_check_branch
          %328 = sbr.rel (0) target = $region41
        $region40: #{linear_resblock.1} parent=32 // pred_region
          %s330 = ssub.s32 16, 1
          loop: start=0, step=1, limit=1
          $region42: #{linear_resblock.1} parent=40 // loop_pre_header
            _
          $region43: #{linear_resblock.1} parent=40 // loop_header
            %s332 = sphi 0, %s336
            %p333 = scmp.ge.s32.totalorder %s332, 1
            %s337 = sphi [#allocation2], [#allocation2]
            %s338 = sphi %s6, %s6
          $region44: #{linear_resblock.1} parent=40 // loop_header_branch
            %335 = sbr.rel (%p333) target = $region48
          $region45: #{linear_resblock.1} parent=40 // loop_body
            %v339 = vld [vmem:[%s337] sm:%s330]
            %340 = vst [vmem:[%s338] sm:%s330] %v339
          $region46: #{linear_resblock.1} parent=40 // loop_footer
            %s336 = sadd.s32 1, %s332
          $region47: #{linear_resblock.1} parent=40 // loop_footer_branch
            %331 = sbr.rel target = $region43
          $region48: #{linear_resblock.1} parent=40 // loop_exit
            _
        $region41: #{linear_resblock.1} parent=32 // pred_fallthru
          _
      $region33: #{linear_resblock.1} parent=28 // pred_fallthru
        _
      %355 = vnop
    $region29: #{linear_resblock.1} parent=1 // pred_fallthru
      _
    // Predicated region
    $region60: #{linear_resblock.1} parent=1 // pred_check
      _
    $region61: #{linear_resblock.1} parent=1 // pred_check_branch
      %357 = sbr.rel (0) target = $region63
    $region62: #{linear_resblock.1} parent=1 // pred_region
      _
    $region63: #{linear_resblock.1} parent=1 // pred_fallthru
      _

</llo_original>
